<compile_context>
chip_gen: v7x
topology: tpu7x:2x2x1
jax: 0.10.0
libtpu: 0.0.40
codegen_flags: <defaults>
</compile_context>

<pallas_src>
from typing import Dict

import jax
import jax.numpy as jnp
from jax.experimental import pallas as pl
from jax.experimental.pallas import tpu as pltpu

# Lane-dense slab layout: last dim rides the 128-lane axis.
_LANES = 1024       # multiple of 128 -> unmasked vector stores
_TILE_ROWS = 512    # 512 x 1024 f32 tile = 2 MiB per buffer


def _copy_kernel(x_ref, o_ref):
    # Whole-tile elementwise pass-through.
    o_ref[...] = x_ref[...]


def _passthrough_slab(x2d: jax.Array) -> jax.Array:
    """Tiled, pipelined, buffer-aliased identity copy of a (rows, _LANES) slab."""
    rows, cols = x2d.shape
    tile_rows = min(_TILE_ROWS, rows)          # rows is always a multiple of 8
    grid = (pl.cdiv(rows, tile_rows),)
    nbytes = x2d.size * x2d.dtype.itemsize
    return pl.pallas_call(
        _copy_kernel,
        out_shape=jax.ShapeDtypeStruct((rows, cols), x2d.dtype),
        grid_spec=pltpu.PrefetchScalarGridSpec(
            num_scalar_prefetch=0,
            grid=grid,
            in_specs=[pl.BlockSpec((tile_rows, cols), lambda i: (i, 0))],
            out_specs=pl.BlockSpec((tile_rows, cols), lambda i: (i, 0)),
        ),
        # Identity: donate the input slab instead of allocating a fresh output.
        input_output_aliases={0: 0},
        cost_estimate=pl.CostEstimate(
            flops=0, transcendentals=0, bytes_accessed=2 * nbytes),
        compiler_params=pltpu.CompilerParams(
            # "parallel" lets the row-tile axis shard across v7x's 2 TCs;
            # harmless (single TC) on v5e/v6e.
            dimension_semantics=("parallel",),
            # Raise v5e's 16 MiB scoped default; equals v6e/v7x default.
            vmem_limit_bytes=32 * 1024 * 1024,
        ),
    )(x2d)


@jax.jit
def _identity_group(*flats: jax.Array) -> jax.Array:
    """Concat 1-D pieces of one dtype, pad to a lane-dense slab, copy on-chip."""
    flat = flats[0] if len(flats) == 1 else jnp.concatenate(flats)
    total = flat.size
    rows = pl.cdiv(total, _LANES)
    rows = pl.cdiv(rows, 8) * 8                # sublane-aligned row count
    padded = rows * _LANES
    if padded != total:
        flat = jnp.pad(flat, (0, padded - total))
    slab = flat.reshape(rows, _LANES)
    return _passthrough_slab(slab).reshape(-1)


class NNModelPallas:
    """JAX/Pallas counterpart of the abstract PyTorch NNModel."""

    def __init__(self, seed: int = None):
        # The PyTorch base class registers no parameters; seed kept for parity.
        self._seed = seed
        self._params: Dict[str, jax.Array] = {}

    def forward(self, inputs: Dict[str, jax.Array]) -> Dict[str, jax.Array]:
        # Concrete pass-through forward (see TODO(synk) above).
        outputs: Dict[str, jax.Array] = {}

        # Group entries by dtype so each fused slab is homogeneous.
        groups: Dict[jnp.dtype, list] = {}
        for name, x in inputs.items():
            groups.setdefault(jnp.dtype(x.dtype), []).append(name)

        for _, names in groups.items():
            metas = []
            flats = []
            for name in names:
                x = inputs[name]
                if x.size == 0:
                    outputs[name] = x          # nothing to move
                    continue
                metas.append((name, x.shape, int(x.size)))
                flats.append(jnp.asarray(x).reshape(-1))
            if not flats:
                continue
            out_flat = _identity_group(*flats)
            off = 0
            for name, shape, sz in metas:
                outputs[name] = out_flat[off:off + sz].reshape(shape)
                off += sz
        return outputs

    def get_parameters(self) -> Dict[str, jax.Array]:
        # Matches nn.Module.named_parameters(): the base class has none.
        return dict(self._params)


if __name__ == "__main__":
    key = jax.random.PRNGKey(0)
    k1, k2 = jax.random.split(key)

    # Small shapes consistent with a dict-of-tensors forward.
    inputs = {
        "input_ids_emb": jax.random.normal(k1, (2, 8, 32), dtype=jnp.float32),
        "image_feats": jax.random.normal(k2, (2, 4, 16, 16), dtype=jnp.float32),
    }

    model = NNModelPallas(seed=0)
    outputs = model.forward(inputs)
    jax.block_until_ready(outputs)

    # Sanity: identity semantics per dict entry, shapes/dtypes preserved.
    for name, x in inputs.items():
        y = outputs[name]
        assert y.shape == x.shape and y.dtype == x.dtype
        assert bool(jnp.allclose(y, x)), f"mismatch in {name}"
    assert model.get_parameters() == {}

    print("KERNEL_OK")
</pallas_src>

<mosaic_0001>
module attributes {stable_mosaic.version = 11 : i64} {
  func.func @_copy_kernel(%arg0: i32, %arg1: memref<8x1024xf32, #tpu.memory_space<vmem>>, %arg2: memref<8x1024xf32, #tpu.memory_space<vmem>>) attributes {dimension_semantics = [#tpu.dimension_semantics<parallel>], iteration_bounds = array<i64: 1>, scalar_prefetch = 0 : i64, scratch_operands = 0 : i64, tpu.core_type = #tpu.core_type<tc>, window_params = [{transform_indices = @transform_0, window_bounds = array<i64: 8, 1024>}, {transform_indices = @transform_1, window_bounds = array<i64: 8, 1024>}]} {
    %c0 = arith.constant 0 : index
    %c0_0 = arith.constant 0 : index
    %0 = vector.load %arg1[%c0, %c0_0] : memref<8x1024xf32, #tpu.memory_space<vmem>>, vector<8x1024xf32>
    %c0_1 = arith.constant 0 : index
    %c0_2 = arith.constant 0 : index
    %1 = vector.load %arg2[%c0_1, %c0_2] : memref<8x1024xf32, #tpu.memory_space<vmem>>, vector<8x1024xf32>
    tpu.vector_store %arg2[%c0_1, %c0_2], %0 {strides = array<i32>} : memref<8x1024xf32, #tpu.memory_space<vmem>>, vector<8x1024xf32>,
    return
  }
  func.func @transform_0(%arg0: i32) -> (i32, i32) {
    %c0_i32 = arith.constant 0 : i32
    %c0_i32_0 = arith.constant 0 : i32
    return %arg0, %c0_i32 : i32, i32
  }
  func.func @transform_1(%arg0: i32) -> (i32, i32) {
    %c0_i32 = arith.constant 0 : i32
    %c0_i32_0 = arith.constant 0 : i32
    return %arg0, %c0_i32 : i32, i32
  }
}

</mosaic_0001>

<llo_original>
// kernel: _identity_group.1
$region0: #{_identity_group.1}
  #allocation0 [shape = 'u32[]', space=smem, size = 0x4, offset = 0x4, fixed_abs, tag = 'smem constant byte address 0x4 - core index']
  #allocation1 [shape = 'u32[144,128]{1,0:T(1,128)}', space=vmem, size = 0x12000, scoped, tag = 'internal scratch']
  %s0 = inlined_call_operand.vmem [shape: f32[8,1024], index: 0, kind: input, shape index: {}, may-alias: {0,1}]
  %s1 = inlined_call_operand.vmem [shape: f32[8,1024], index: 1, kind: output, shape index: {}, may-alias: {0,1}]
  %s2 = sld [smem:[#allocation0]]
  $region14: #{_identity_group.1} parent=0
    _
  %s4 = ssub.s32 1, %s2
  %s5 = scalar_select 0, %s4, %s2
  // Predicated region
  $region2: #{_identity_group.1} parent=0 // pred_check
    _
  $region3: #{_identity_group.1} parent=0 // pred_check_branch
    %7 = sbr.rel (0) target = $region5
  $region4: #{_identity_group.1} parent=0 // pred_region
    _
  $region5: #{_identity_group.1} parent=0 // pred_fallthru
    _
  %v8 = vld [vmem:[%s0] sm:$0xff]
  %v9 = vld [vmem:[%s0 + $0x8] sm:$0xff]
  %v10 = vld [vmem:[%s0 + $0x10] sm:$0xff]
  %v11 = vld [vmem:[%s0 + $0x18] sm:$0xff]
  %v12 = vld [vmem:[%s0 + $0x20] sm:$0xff]
  %v13 = vld [vmem:[%s0 + $0x28] sm:$0xff]
  %v14 = vld [vmem:[%s0 + $0x30] sm:$0xff]
  %v15 = vld [vmem:[%s0 + $0x38] sm:$0xff]
  %16 = vst [vmem:[%s1] sm:$0xff] %v8
  %17 = vst [vmem:[%s1 + $0x8] sm:$0xff] %v9
  %18 = vst [vmem:[%s1 + $0x10] sm:$0xff] %v10
  %19 = vst [vmem:[%s1 + $0x18] sm:$0xff] %v11
  %20 = vst [vmem:[%s1 + $0x20] sm:$0xff] %v12
  %21 = vst [vmem:[%s1 + $0x28] sm:$0xff] %v13
  %22 = vst [vmem:[%s1 + $0x30] sm:$0xff] %v14
  %23 = vst [vmem:[%s1 + $0x38] sm:$0xff] %v15
  // Predicated region
  $region6: #{_identity_group.1} parent=0 // pred_check
    _
  $region7: #{_identity_group.1} parent=0 // pred_check_branch
    %25 = sbr.rel (0) target = $region9
  $region8: #{_identity_group.1} parent=0 // pred_region
    _
  $region9: #{_identity_group.1} parent=0 // pred_fallthru
    _
  // Predicated region
  $region10: #{_identity_group.1} parent=0 // pred_check
    _
  $region11: #{_identity_group.1} parent=0 // pred_check_branch
    %27 = sbr.rel (0) target = $region13
  $region12: #{_identity_group.1} parent=0 // pred_region
    _
  $region13: #{_identity_group.1} parent=0 // pred_fallthru
    _

</llo_original>
